<compile_context>
chip_gen: v7x
topology: tpu7x:2x2x1
jax: 0.10.0
libtpu: 0.0.40
codegen_flags: <defaults>
</compile_context>

<pallas_src>
import functools

import jax
import jax.numpy as jnp
from jax.experimental import pallas as pl
from jax.experimental.pallas import tpu as pltpu


LN_EPS = 1e-5  # torch.nn.LayerNorm default eps


def _conv_ln_relu_kernel(patches_ref, w_ref, gamma_ref, beta_ref, o_ref, *,
                         inv_count):
    # patches_ref: (1, CKK, Ppad)   w_ref: (Cout, CKK)
    # gamma/beta : (Cout, Ppad)     o_ref: (1, Cout, Ppad)
    x = patches_ref[0]                                   # (CKK, Ppad)
    # Conv-as-matmul on the MXU; output is lane-dense (P on the lane axis).
    y = jnp.dot(w_ref[...], x,
                preferred_element_type=jnp.float32)      # (Cout, Ppad)

    # LayerNorm over the whole [Cout, Hout, Wout] slab of this batch element.
    # One-pass stats: padded columns are exactly zero (no conv bias), so they
    # contribute nothing to sum / sum-of-squares; divide by the true count.
    s = jnp.sum(y)
    ss = jnp.sum(y * y)
    mean = s * inv_count
    var = ss * inv_count - mean * mean                   # biased var (torch LN)
    y_hat = (y - mean) * jax.lax.rsqrt(var + LN_EPS)
    z = y_hat * gamma_ref[...] + beta_ref[...]

    # ReLU
    o_ref[0] = jnp.maximum(z, 0.0).astype(o_ref.dtype)


def _im2col_cfirst(x, k):
    """x: (N, Cin, H, W) -> patches (N, Cin*k*k, Hout*Wout), valid conv, stride 1."""
    n, cin, h, w = x.shape
    hout, wout = h - k + 1, w - k + 1
    pieces = []
    for di in range(k):
        for dj in range(k):
            pieces.append(x[:, :, di:di + hout, dj:dj + wout])
    p = jnp.stack(pieces, axis=2)                        # (N, Cin, k*k, Hout, Wout)
    return p.reshape(n, cin * k * k, hout * wout), hout, wout


@functools.partial(jax.jit, static_argnames=("kernel_size",))
def conv_norm_in_rel_forward(x, conv_w, ln_gamma, ln_beta, *, kernel_size):
    """Forward pass of conv_norm_in_rel (Conv2d no-bias -> LayerNorm -> ReLU).

    x        : (N, Cin, H, W)          NCHW (PyTorch layout)
    conv_w   : (Cout, Cin, k, k)       PyTorch Conv2d weight layout
    ln_gamma : (Cout, Hout, Wout)      PyTorch LayerNorm weight layout
    ln_beta  : (Cout, Hout, Wout)
    returns  : (N, Cout, Hout, Wout)   NCHW
    """
    n, cin, _, _ = x.shape
    cout = conv_w.shape[0]
    k = kernel_size

    patches, hout, wout = _im2col_cfirst(x, k)           # (N, CKK, P)
    p = hout * wout
    ckk = cin * k * k
    p_pad = pl.cdiv(p, 128) * 128                        # lane-dense last dim

    # Zero-pad the spatial axis up to a multiple of 128 (unmasked vld/vst).
    patches = jnp.pad(patches, ((0, 0), (0, 0), (0, p_pad - p)))
    w_mat = conv_w.reshape(cout, ckk)                    # (Cout, CKK) — no transpose
    gamma = jnp.pad(ln_gamma.reshape(cout, p), ((0, 0), (0, p_pad - p)))
    beta = jnp.pad(ln_beta.reshape(cout, p), ((0, 0), (0, p_pad - p)))

    kernel = functools.partial(_conv_ln_relu_kernel,
                               inv_count=1.0 / float(cout * p))

    out = pl.pallas_call(
        kernel,
        out_shape=jax.ShapeDtypeStruct((n, cout, p_pad), jnp.float32),
        grid_spec=pltpu.PrefetchScalarGridSpec(
            num_scalar_prefetch=0,
            grid=(n,),
            in_specs=[
                pl.BlockSpec((1, ckk, p_pad), lambda b: (b, 0, 0)),
                pl.BlockSpec((cout, ckk), lambda b: (0, 0)),
                pl.BlockSpec((cout, p_pad), lambda b: (0, 0)),
                pl.BlockSpec((cout, p_pad), lambda b: (0, 0)),
            ],
            out_specs=pl.BlockSpec((1, cout, p_pad), lambda b: (b, 0, 0)),
        ),
        compiler_params=pltpu.CompilerParams(
            dimension_semantics=("parallel",)),
    )(patches, w_mat, gamma, beta)

    # (N, Cout, Ppad) -> strip pad -> (N, Cout, Hout, Wout); already NCHW order.
    return out[:, :, :p].reshape(n, cout, hout, wout)


def _reference(x, conv_w, ln_gamma, ln_beta):
    """Pure-JAX reference matching the PyTorch module semantics."""
    y = jax.lax.conv_general_dilated(
        x, conv_w, window_strides=(1, 1), padding="VALID",
        dimension_numbers=("NCHW", "OIHW", "NCHW"))
    mean = jnp.mean(y, axis=(1, 2, 3), keepdims=True)
    var = jnp.mean((y - mean) ** 2, axis=(1, 2, 3), keepdims=True)
    y = (y - mean) / jnp.sqrt(var + LN_EPS)
    y = y * ln_gamma[None] + ln_beta[None]
    return jnp.maximum(y, 0.0)


if __name__ == "__main__":
    # Module hyper-params: dim=2, in_channels=4, out_channels=8, kernel_size=3,
    # im_sz=(14,14) (post-conv), stride=1, same_padding=False -> padding=0,
    # normalization='layer', active_unit='relu', conv bias disabled.
    N, CIN, COUT, K, H, W = 2, 4, 8, 3, 16, 16
    HOUT, WOUT = H - K + 1, W - K + 1

    key = jax.random.PRNGKey(0)
    kx, kw, kg, kb = jax.random.split(key, 4)

    x = jax.random.normal(kx, (N, CIN, H, W), dtype=jnp.float32)
    fan_in = CIN * K * K
    conv_w = jax.random.normal(kw, (COUT, CIN, K, K), dtype=jnp.float32) / jnp.sqrt(fan_in)
    ln_gamma = 1.0 + 0.1 * jax.random.normal(kg, (COUT, HOUT, WOUT), dtype=jnp.float32)
    ln_beta = 0.1 * jax.random.normal(kb, (COUT, HOUT, WOUT), dtype=jnp.float32)

    out = conv_norm_in_rel_forward(x, conv_w, ln_gamma, ln_beta, kernel_size=K)
    out = jax.block_until_ready(out)

    ref = _reference(x, conv_w, ln_gamma, ln_beta)
    assert out.shape == (N, COUT, HOUT, WOUT)
    assert jnp.allclose(out, ref, atol=2e-4, rtol=2e-4), (
        float(jnp.max(jnp.abs(out - ref))))

    print("KERNEL_OK")
</pallas_src>

<mosaic_0001>
module attributes {stable_mosaic.version = 11 : i64} {
  func.func @_conv_ln_relu_kernel(%arg0: i32, %arg1: memref<1x36x256xf32, #tpu.memory_space<vmem>>, %arg2: memref<8x36xf32, #tpu.memory_space<vmem>>, %arg3: memref<8x256xf32, #tpu.memory_space<vmem>>, %arg4: memref<8x256xf32, #tpu.memory_space<vmem>>, %arg5: memref<1x8x256xf32, #tpu.memory_space<vmem>>) attributes {dimension_semantics = [#tpu.dimension_semantics<parallel>], iteration_bounds = array<i64: 2>, scalar_prefetch = 0 : i64, scratch_operands = 0 : i64, tpu.core_type = #tpu.core_type<tc>, window_params = [{transform_indices = @transform_0, window_bounds = array<i64: 1, 36, 256>}, {pipeline_mode = #tpu.pipeline_mode<synchronous>, transform_indices = @transform_1, window_bounds = array<i64: 8, 36>}, {pipeline_mode = #tpu.pipeline_mode<synchronous>, transform_indices = @transform_2, window_bounds = array<i64: 8, 256>}, {pipeline_mode = #tpu.pipeline_mode<synchronous>, transform_indices = @transform_3, window_bounds = array<i64: 8, 256>}, {transform_indices = @transform_4, window_bounds = array<i64: 1, 8, 256>}]} {
    %c0 = arith.constant 0 : index
    %c0_0 = arith.constant 0 : index
    %c0_1 = arith.constant 0 : index
    %0 = vector.load %arg1[%c0, %c0_0, %c0_1] : memref<1x36x256xf32, #tpu.memory_space<vmem>>, vector<1x36x256xf32>
    %1 = vector.shape_cast %0 : vector<1x36x256xf32> to vector<36x256xf32>
    %c0_2 = arith.constant 0 : index
    %c0_3 = arith.constant 0 : index
    %2 = vector.load %arg2[%c0_2, %c0_3] : memref<8x36xf32, #tpu.memory_space<vmem>>, vector<8x36xf32>
    %cst = arith.constant dense<0.000000e+00> : vector<8x256xf32>
    %3 = tpu.matmul %2, %1, %cst {dimension_numbers = #tpu.dot_dimension_numbers<[1], [0], [0], [1], [0, 0, 1, 1], [], []>} : vector<8x36xf32>, vector<36x256xf32>, vector<8x256xf32> -> vector<8x256xf32>
    %4 = vector.shape_cast %3 : vector<8x256xf32> to vector<1x8x256xf32>
    %cst_4 = arith.constant dense<0.000000e+00> : vector<1xf32>
    %5 = vector.multi_reduction <add>, %4, %cst_4 [1, 2] : vector<1x8x256xf32> to vector<1xf32>
    %6 = vector.shape_cast %5 : vector<1xf32> to vector<1x1x1xf32>
    %7 = vector.extract %6[0, 0, 0] : f32 from vector<1x1x1xf32>
    %8 = arith.mulf %3, %3 : vector<8x256xf32>
    %9 = vector.shape_cast %8 : vector<8x256xf32> to vector<1x8x256xf32>
    %cst_5 = arith.constant dense<0.000000e+00> : vector<1xf32>
    %10 = vector.multi_reduction <add>, %9, %cst_5 [1, 2] : vector<1x8x256xf32> to vector<1xf32>
    %11 = vector.shape_cast %10 : vector<1xf32> to vector<1x1x1xf32>
    %12 = vector.extract %11[0, 0, 0] : f32 from vector<1x1x1xf32>
    %cst_6 = arith.constant 6.37755089E-4 : f32
    %13 = arith.mulf %7, %cst_6 : f32
    %cst_7 = arith.constant 6.37755089E-4 : f32
    %14 = arith.mulf %12, %cst_7 : f32
    %15 = arith.mulf %13, %13 : f32
    %16 = arith.subf %14, %15 : f32
    %17 = vector.broadcast %13 : f32 to vector<8x256xf32>
    %18 = arith.subf %3, %17 : vector<8x256xf32>
    %cst_8 = arith.constant 9.99999974E-6 : f32
    %19 = arith.addf %16, %cst_8 : f32
    %20 = math.rsqrt %19 : f32
    %21 = vector.broadcast %20 : f32 to vector<8x256xf32>
    %22 = arith.mulf %18, %21 : vector<8x256xf32>
    %c0_9 = arith.constant 0 : index
    %c0_10 = arith.constant 0 : index
    %23 = vector.load %arg3[%c0_9, %c0_10] : memref<8x256xf32, #tpu.memory_space<vmem>>, vector<8x256xf32>
    %24 = arith.mulf %22, %23 : vector<8x256xf32>
    %c0_11 = arith.constant 0 : index
    %c0_12 = arith.constant 0 : index
    %25 = vector.load %arg4[%c0_11, %c0_12] : memref<8x256xf32, #tpu.memory_space<vmem>>, vector<8x256xf32>
    %26 = arith.addf %24, %25 : vector<8x256xf32>
    %cst_13 = arith.constant 0.000000e+00 : f32
    %27 = vector.broadcast %cst_13 : f32 to vector<8x256xf32>
    %28 = arith.maximumf %26, %27 : vector<8x256xf32>
    %c0_14 = arith.constant 0 : index
    %c0_15 = arith.constant 0 : index
    %c0_16 = arith.constant 0 : index
    %29 = vector.load %arg5[%c0_14, %c0_15, %c0_16] : memref<1x8x256xf32, #tpu.memory_space<vmem>>, vector<1x8x256xf32>
    %30 = vector.shape_cast %29 : vector<1x8x256xf32> to vector<8x256xf32>
    %31 = vector.shape_cast %28 : vector<8x256xf32> to vector<1x8x256xf32>
    tpu.vector_store %arg5[%c0_14, %c0_15, %c0_16], %31 {strides = array<i32>} : memref<1x8x256xf32, #tpu.memory_space<vmem>>, vector<1x8x256xf32>,
    return
  }
  func.func @transform_0(%arg0: i32) -> (i32, i32, i32) {
    %c0_i32 = arith.constant 0 : i32
    %c0_i32_0 = arith.constant 0 : i32
    %c0_i32_1 = arith.constant 0 : i32
    return %arg0, %c0_i32, %c0_i32_0 : i32, i32, i32
  }
  func.func @transform_1(%arg0: i32) -> (i32, i32) {
    %c0_i32 = arith.constant 0 : i32
    %c0_i32_0 = arith.constant 0 : i32
    %c0_i32_1 = arith.constant 0 : i32
    return %c0_i32, %c0_i32_0 : i32, i32
  }
  func.func @transform_2(%arg0: i32) -> (i32, i32) {
    %c0_i32 = arith.constant 0 : i32
    %c0_i32_0 = arith.constant 0 : i32
    %c0_i32_1 = arith.constant 0 : i32
    return %c0_i32, %c0_i32_0 : i32, i32
  }
  func.func @transform_3(%arg0: i32) -> (i32, i32) {
    %c0_i32 = arith.constant 0 : i32
    %c0_i32_0 = arith.constant 0 : i32
    %c0_i32_1 = arith.constant 0 : i32
    return %c0_i32, %c0_i32_0 : i32, i32
  }
  func.func @transform_4(%arg0: i32) -> (i32, i32, i32) {
    %c0_i32 = arith.constant 0 : i32
    %c0_i32_0 = arith.constant 0 : i32
    %c0_i32_1 = arith.constant 0 : i32
    return %arg0, %c0_i32, %c0_i32_0 : i32, i32, i32
  }
}

</mosaic_0001>

<llo_original>
// kernel: conv_norm_in_rel_forward.1
$region0: #{conv_norm_in_rel_forward.1}
  #allocation0 [shape = 'u32[]', space=smem, size = 0x4, offset = 0x4, fixed_abs, tag = 'smem constant byte address 0x4 - core index']
  #allocation1 [shape = 'u32[144,128]{1,0:T(1,128)}', space=vmem, size = 0x12000, scoped, tag = 'internal scratch']
  %s0 = inlined_call_operand.vmem [shape: f32[2,36,256], index: 0, kind: input, shape index: {}]
  %s1 = inlined_call_operand.vmem [shape: f32[8,36], index: 1, kind: input, shape index: {}]
  %s2 = inlined_call_operand.vmem [shape: f32[8,256], index: 2, kind: input, shape index: {}]
  %s3 = inlined_call_operand.vmem [shape: f32[8,256], index: 3, kind: input, shape index: {}]
  %s4 = inlined_call_operand.vmem [shape: f32[2,8,256], index: 4, kind: output, shape index: {}]
  %s5 = sld [smem:[#allocation0]]
  $region49: #{conv_norm_in_rel_forward.1} parent=0
    _
  %s7 = ssub.s32 1, %s5
  %s8 = scalar_select 0, %s7, %s5
  loop: start=0, step=1, limit=4
  $region2: #{conv_norm_in_rel_forward.1} parent=0 // loop_pre_header
    _
  $region3: #{conv_norm_in_rel_forward.1} parent=0 // loop_header
    %s10 = sphi 0, %s14
    %p11 = scmp.ge.s32.totalorder %s10, 4
    %s20 = sphi 0, %s22
    %s23 = sphi 0, %s20
    %s24 = sphi 0, %s23
    %s40 = sphi 0, %s24
    %s44 = sphi 0, %s44
    %s46 = sphi 0, %s44
    %s47 = sphi 0, %s46
    %s61 = sphi 0, %s47
    %s65 = sphi 0, %s65
    %s67 = sphi 0, %s65
    %s68 = sphi 0, %s67
    %s82 = sphi 0, %s68
    %s86 = sphi 0, %s86
    %s88 = sphi 0, %s86
    %s89 = sphi 0, %s88
    %s103 = sphi 0, %s89
    %s109 = sphi 0, %s111
    %s112 = sphi 0, %s109
    %s113 = sphi 0, %s112
    %s129 = sphi 0, %s113
  $region4: #{conv_norm_in_rel_forward.1} parent=0 // loop_header_branch
    %13 = sbr.rel (%p11) target = $region8
  $region5: #{conv_norm_in_rel_forward.1} parent=0 // loop_body
    %s15 = ssub.s32 %s10, 1
    %s16 = ssub.s32 %s10, 2
    %s17 = sadd.s32 %s10, 1
    %s18 = ssub.s32 %s10, %s17
    %p19 = scmp.eq.s32.totalorder %s18, 0
    %s21 = sadd.s32 %s20, 1
    %s22 = scalar_select %p19, %s20, %s21
    %p25 = pneg %p19
    %p26 = scmp.eq.s32.totalorder %s10, 1
    %p27 = por %p25, %p26
    %p28 = scmp.ne.s32.totalorder %s20, %s23
    %p29 = scmp.eq.s32.totalorder %s10, 0
    %p30 = por %p28, %p29
    %p31 = scmp.ne.s32.totalorder %s20, %s23
    %p32 = scmp.eq.s32.totalorder %s15, 1
    %p33 = por %p31, %p32
    %p34 = scmp.ne.s32.totalorder %s23, %s24
    %p35 = scmp.eq.s32.totalorder %s15, 0
    %p36 = por %p34, %p35
    %p37 = scmp.ne.s32.totalorder %s23, %s24
    %p38 = scmp.eq.s32.totalorder %s16, 1
    %p39 = por %p37, %p38
    %p41 = scmp.ne.s32.totalorder %s24, %s40
    %p42 = scmp.eq.s32.totalorder %s16, 0
    %p43 = por %p41, %p42
    %s45 = sadd.s32 %s44, 1
    %p48 = scmp.eq.s32.totalorder %s10, 1
    %p49 = scmp.ne.s32.totalorder %s44, %s46
    %p50 = scmp.eq.s32.totalorder %s10, 0
    %p51 = por %p49, %p50
    %p52 = scmp.ne.s32.totalorder %s44, %s46
    %p53 = scmp.eq.s32.totalorder %s15, 1
    %p54 = por %p52, %p53
    %p55 = scmp.ne.s32.totalorder %s46, %s47
    %p56 = scmp.eq.s32.totalorder %s15, 0
    %p57 = por %p55, %p56
    %p58 = scmp.ne.s32.totalorder %s46, %s47
    %p59 = scmp.eq.s32.totalorder %s16, 1
    %p60 = por %p58, %p59
    %p62 = scmp.ne.s32.totalorder %s47, %s61
    %p63 = scmp.eq.s32.totalorder %s16, 0
    %p64 = por %p62, %p63
    %s66 = sadd.s32 %s65, 1
    %p69 = scmp.eq.s32.totalorder %s10, 1
    %p70 = scmp.ne.s32.totalorder %s65, %s67
    %p71 = scmp.eq.s32.totalorder %s10, 0
    %p72 = por %p70, %p71
    %p73 = scmp.ne.s32.totalorder %s65, %s67
    %p74 = scmp.eq.s32.totalorder %s15, 1
    %p75 = por %p73, %p74
    %p76 = scmp.ne.s32.totalorder %s67, %s68
    %p77 = scmp.eq.s32.totalorder %s15, 0
    %p78 = por %p76, %p77
    %p79 = scmp.ne.s32.totalorder %s67, %s68
    %p80 = scmp.eq.s32.totalorder %s16, 1
    %p81 = por %p79, %p80
    %p83 = scmp.ne.s32.totalorder %s68, %s82
    %p84 = scmp.eq.s32.totalorder %s16, 0
    %p85 = por %p83, %p84
    %s87 = sadd.s32 %s86, 1
    %p90 = scmp.eq.s32.totalorder %s10, 1
    %p91 = scmp.ne.s32.totalorder %s86, %s88
    %p92 = scmp.eq.s32.totalorder %s10, 0
    %p93 = por %p91, %p92
    %p94 = scmp.ne.s32.totalorder %s86, %s88
    %p95 = scmp.eq.s32.totalorder %s15, 1
    %p96 = por %p94, %p95
    %p97 = scmp.ne.s32.totalorder %s88, %s89
    %p98 = scmp.eq.s32.totalorder %s15, 0
    %p99 = por %p97, %p98
    %p100 = scmp.ne.s32.totalorder %s88, %s89
    %p101 = scmp.eq.s32.totalorder %s16, 1
    %p102 = por %p100, %p101
    %p104 = scmp.ne.s32.totalorder %s89, %s103
    %p105 = scmp.eq.s32.totalorder %s16, 0
    %p106 = por %p104, %p105
    %s107 = ssub.s32 %s10, %s17
    %p108 = scmp.eq.s32.totalorder %s107, 0
    %s110 = sadd.s32 %s109, 1
    %s111 = scalar_select %p108, %s109, %s110
    %p114 = pneg %p108
    %p115 = scmp.eq.s32.totalorder %s10, 1
    %p116 = por %p114, %p115
    %p117 = scmp.ne.s32.totalorder %s109, %s112
    %p118 = scmp.eq.s32.totalorder %s10, 0
    %p119 = por %p117, %p118
    %p120 = scmp.ne.s32.totalorder %s109, %s112
    %p121 = scmp.eq.s32.totalorder %s15, 1
    %p122 = por %p120, %p121
    %p123 = scmp.ne.s32.totalorder %s112, %s113
    %p124 = scmp.eq.s32.totalorder %s15, 0
    %p125 = por %p123, %p124
    %p126 = scmp.ne.s32.totalorder %s112, %s113
    %p127 = scmp.eq.s32.totalorder %s16, 1
    %p128 = por %p126, %p127
    %p130 = scmp.ne.s32.totalorder %s113, %s129
    %p131 = scmp.eq.s32.totalorder %s16, 0
    %p132 = por %p130, %p131
    %p133 = scmp.le.s32.totalorder 1, %s10
    %p134 = scmp.lt.s32.totalorder %s10, 3
    %p135 = pnand %p133, %p134
    %p136 = pneg %p135
    // Predicated region
    $region9: #{conv_norm_in_rel_forward.1} parent=5 // pred_check
      _
    $region10: #{conv_norm_in_rel_forward.1} parent=5 // pred_check_branch
      %138 = sbr.rel (%p135) target = $region12
    $region11: #{conv_norm_in_rel_forward.1} parent=5 // pred_region
      %s139 = ssub.s32 %s10, 1
      // Predicated region
      $region13: #{conv_norm_in_rel_forward.1} parent=11 // pred_check
        %p140 = pneg %p57
      $region14: #{conv_norm_in_rel_forward.1} parent=11 // pred_check_branch
        %142 = sbr.rel (%p140) target = $region16
      $region15: #{conv_norm_in_rel_forward.1} parent=11 // pred_region
        _
      $region16: #{conv_norm_in_rel_forward.1} parent=11 // pred_fallthru
        _
      // Predicated region
      $region17: #{conv_norm_in_rel_forward.1} parent=11 // pred_check
        %p143 = pneg %p78
      $region18: #{conv_norm_in_rel_forward.1} parent=11 // pred_check_branch
        %145 = sbr.rel (%p143) target = $region20
      $region19: #{conv_norm_in_rel_forward.1} parent=11 // pred_region
        _
      $region20: #{conv_norm_in_rel_forward.1} parent=11 // pred_fallthru
        _
      // Predicated region
      $region21: #{conv_norm_in_rel_forward.1} parent=11 // pred_check
        %p146 = pneg %p99
      $region22: #{conv_norm_in_rel_forward.1} parent=11 // pred_check_branch
        %148 = sbr.rel (%p146) target = $region24
      $region23: #{conv_norm_in_rel_forward.1} parent=11 // pred_region
        _
      $region24: #{conv_norm_in_rel_forward.1} parent=11 // pred_fallthru
        _
    $region12: #{conv_norm_in_rel_forward.1} parent=5 // pred_fallthru
      _
    %p149 = scmp.lt.s32.totalorder %s10, 2
    // Predicated region
    $region25: #{conv_norm_in_rel_forward.1} parent=5 // pred_check
      %p150 = pneg %p149
    $region26: #{conv_norm_in_rel_forward.1} parent=5 // pred_check_branch
      %152 = sbr.rel (%p150) target = $region28
    $region27: #{conv_norm_in_rel_forward.1} parent=5 // pred_region
      // Predicated region
      $region29: #{conv_norm_in_rel_forward.1} parent=27 // pred_check
        %p153 = pneg %p30
      $region30: #{conv_norm_in_rel_forward.1} parent=27 // pred_check_branch
        %155 = sbr.rel (%p153) target = $region32
      $region31: #{conv_norm_in_rel_forward.1} parent=27 // pred_region
        %p156 = scmp.lt.s32.totalorder %s10, 1
        %s157 = scalar_select %p156, %s10, 1
        %s158 = smul.addr %s157, 10
        %s159 = smul.addr %s158, 8
        %s160 = scalar_lea.vmem %s0, %s159
      $region32: #{conv_norm_in_rel_forward.1} parent=27 // pred_fallthru
        _
    $region28: #{conv_norm_in_rel_forward.1} parent=5 // pred_fallthru
      _
    %p161 = scmp.le.s32.totalorder 1, %s10
    %p162 = scmp.lt.s32.totalorder %s10, 3
    %p163 = pnand %p161, %p162
    %p164 = pneg %p163
    // Predicated region
    $region33: #{conv_norm_in_rel_forward.1} parent=5 // pred_check
      _
    $region34: #{conv_norm_in_rel_forward.1} parent=5 // pred_check_branch
      %166 = sbr.rel (%p163) target = $region36
    $region35: #{conv_norm_in_rel_forward.1} parent=5 // pred_region
      %s167 = ssub.s32 %s10, 1
      %p168 = scmp.lt.s32.totalorder %s15, 1
      %s169 = scalar_select %p168, %s15, 1
      %s170 = smul.addr %s169, 10
      %s171 = smul.addr %s170, 8
      %s172 = scalar_lea.vmem %s0, %s171
      %p173 = pneg %p36
      %p174 = pneg %p33
      %p175 = pneg %p57
      %p176 = pneg %p54
      %p177 = pneg %p78
      %p178 = pneg %p75
      %p179 = pneg %p99
      %p180 = pneg %p96
      %p181 = pneg %p125
      %p182 = pneg %p122
      %p183 = scmp.lt.s32.totalorder %s15, 1
      %s184 = scalar_select %p183, %s15, 1
      %s185 = smul.addr %s184, 2
      %s186 = smul.addr %s185, 8
      %s187 = scalar_lea.vmem %s4, %s186
      %p188 = scmp.lt.s32.totalorder %s15, 1
      %s189 = scalar_select %p188, %s15, 1
      %s190 = smul.addr %s189, 10
      %s191 = smul.addr %s190, 8
      %s192 = scalar_lea.vmem %s0, %s191
      %p193 = scmp.lt.s32.totalorder %s15, 1
      %s194 = scalar_select %p193, %s15, 1
      %s195 = smul.addr %s194, 2
      %s196 = smul.addr %s195, 8
      %s197 = scalar_lea.vmem %s4, %s196
      %v198 = vld [vmem:[%s192] sm:$0xff]
      %v199 = vld [vmem:[%s192 + $0x8] sm:$0xff]
      %v200 = vld [vmem:[%s192 + $0x10] sm:$0xff]
      %v201 = vld [vmem:[%s192 + $0x18] sm:$0xff]
      %v202 = vld [vmem:[%s192 + $0x20] sm:$0xff]
      %v203 = vld [vmem:[%s192 + $0x28] sm:$0xff]
      %v204 = vld [vmem:[%s192 + $0x30] sm:$0xff]
      %v205 = vld [vmem:[%s192 + $0x38] sm:$0xff]
      %v206 = vld [vmem:[%s192 + $0x40] sm:$0xf]
      %v207 = vld [vmem:[%s192 + $0x48] sm:$0xf]
      %v208 = vld [vmem:[%s1] sm:$0xff]
      %vm209 = vcmask 293888
      %v211 = vsel %vm209, %v208, 0
      %vm213 = vcmask 1043456
      %v215 = vsel %vm213, %v206, 0
      %v218 = vsel %vm213, %v207, 0
      %220 = vmatprep.subr.mxu0 %v199
      %221 = vmatpush1.msra.mxu0 %v198
      %222 = vmatprep.subr.mxu0 %v201
      %223 = vmatpush1.msra.mxu0 %v200
      %224 = vmatprep.subr.mxu0 %v203
      %225 = vmatpush1.msra.mxu0 %v202
      %226 = vmatprep.subr.mxu0 %v205
      %227 = vmatpush1.msra.mxu0 %v204
      %228 = vmatprep.subr.mxu0 %v218
      %229 = vmatpush1.msra.mxu0 %v215
      %230 = vmatprep.subr.mxu0 0.0
      %231 = vmatpush1.msra.mxu0 0.0
      %232 = vmatprep.subr.mxu0 0.0
      %233 = vmatpush1.msra.mxu0 0.0
      %234 = vmatprep.subr.mxu0 0.0
      %235 = vmatpush1.msra.mxu0 0.0
      %236 = vmatprep.subr.mxu0 0.0
      %237 = vmatpush1.msra.mxu0 0.0
      %238 = vmatprep.subr.mxu0 0.0
      %239 = vmatpush1.msra.mxu0 0.0
      %240 = vmatprep.subr.mxu0 0.0
      %241 = vmatpush1.msra.mxu0 0.0
      %242 = vmatprep.subr.mxu0 0.0
      %243 = vmatpush1.msra.mxu0 0.0
      %244 = vmatprep.subr.mxu0 0.0
      %245 = vmatpush1.msra.mxu0 0.0
      %246 = vmatprep.subr.mxu0 0.0
      %247 = vmatpush1.msra.mxu0 0.0
      %248 = vmatprep.subr.mxu0 0.0
      %249 = vmatpush1.msra.mxu0 0.0
      %250 = vmatprep.subr.mxu0 0.0
      %251 = vmatpush1.msra.mxu0 0.0
      %252 = vmatprep.subr.mxu0 0.0
      %253 = vmatpush1.msra.mxu0 0.0
      %254 = vmatprep.subr.mxu0 0.0
      %255 = vmatpush1.msra.mxu0 0.0
      %256 = vmatprep.subr.mxu0 0.0
      %257 = vmatpush1.msra.mxu0 0.0
      %258 = vmatprep.subr.mxu0 0.0
      %259 = vmatpush1.msra.mxu0 0.0
      %260 = vmatprep.subr.mxu0 0.0
      %261 = vmatpush1.msra.mxu0 0.0
      %262 = vmatprep.subr.mxu0 0.0
      %263 = vmatpush1.msra.mxu0 0.0
      %264 = vmatprep.subr.mxu0 0.0
      %265 = vmatpush1.msra.mxu0 0.0
      %266 = vmatprep.subr.mxu0 0.0
      %267 = vmatpush1.msra.mxu0 0.0
      %268 = vmatprep.subr.mxu0 0.0
      %269 = vmatpush1.msra.mxu0 0.0
      %270 = vmatprep.subr.mxu0 0.0
      %271 = vmatpush1.msra.mxu0 0.0
      %272 = vmatprep.subr.mxu0 0.0
      %273 = vmatpush1.msra.mxu0 0.0
      %274 = vmatprep.subr.mxu0 0.0
      %275 = vmatpush1.msra.mxu0 0.0
      %276 = vmatprep.subr.mxu0 0.0
      %277 = vmatpush1.msra.mxu0 0.0
      %278 = vmatprep.subr.mxu0 0.0
      %279 = vmatpush1.msra.mxu0 0.0
      %280 = vmatprep.subr.mxu0 0.0
      %281 = vmatpush1.msra.mxu0 0.0
      %282 = vmatprep.subr.mxu0 0.0
      %283 = vmatpush1.msra.mxu0 0.0
      %284 = vmatprep.mubr.f32.mxu0 0.0
      %285 = vmatmul.mubr.f32.gmra.mrb[0].mxu0 %v211
      %v286 = vpop.f32.mrb[0].mxu0
      %v287 = vadd.f32 0.0, %v286
      %v288 = vpop.f32.mrb[0].mxu0
      %v289 = vadd.f32 0.0, %v288
      %290 = vdwg.mxu0
      %v291 = vadd.f32 %v287, %v289
      %292 = vadd.xlane.f32.xlu0 %v291
      %v293 = vpop.xlane.xlu0 %292
      %v294 = vrot.slane %v293, 4
      %v295 = vadd.f32 %v293, %v294
      %v296 = vrot.slane %v295, 2
      %v297 = vadd.f32 %v295, %v296
      %v298 = vrot.slane %v297, 1
      %v299 = vadd.f32 %v297, %v298
      %s300 = vtos %v299
      %v301 = vmul.f32 %v287, %v287
      %v302 = vmul.f32 %v289, %v289
      %v303 = vadd.f32 %v301, %v302
      %304 = vadd.xlane.f32.xlu0 %v303
      %v305 = vpop.xlane.xlu0 %304
      %v306 = vrot.slane %v305, 4
      %v307 = vadd.f32 %v305, %v306
      %v308 = vrot.slane %v307, 2
      %v309 = vadd.f32 %v307, %v308
      %v310 = vrot.slane %v309, 1
      %v311 = vadd.f32 %v309, %v310
      %s312 = vtos %v311
      %s313 = smul.f32 %s300, 0.0006377551
      %s314 = smul.f32 %s312, 0.0006377551
      %s315 = smul.f32 %s313, %s313
      %s316 = ssub.f32 %s314, %s315
      %v317 = vstv %s313
      %v318 = vsub.f32 %v287, %v317
      %v319 = vsub.f32 %v289, %v317
      %s320 = sadd.f32 %s316, 1e-05
      %v321 = vstv %s320
      %v322 = vrsqrt.pop %v321
      %s323 = vtos %v322
      %v324 = vstv %s323
      %v325 = vmul.f32 %v318, %v324
      %v326 = vmul.f32 %v319, %v324
      %v327 = vld [vmem:[%s2] sm:$0xff]
      %v328 = vld [vmem:[%s2 + $0x8] sm:$0xff]
      %v329 = vmul.f32 %v325, %v327
      %v330 = vmul.f32 %v326, %v328
      %v331 = vld [vmem:[%s3] sm:$0xff]
      %v332 = vld [vmem:[%s3 + $0x8] sm:$0xff]
      %v333 = vadd.f32 %v329, %v331
      %v334 = vadd.f32 %v330, %v332
      %v335 = vmax.f32 %v333, 0.0
      %v336 = vmax.f32 %v334, 0.0
      %337 = vst [vmem:[%s197] sm:$0xff] %v335
      %338 = vst [vmem:[%s197 + $0x8] sm:$0xff] %v336
      %p339 = scmp.lt.s32.totalorder %s15, 1
      %s340 = scalar_select %p339, %s15, 1
      %s341 = smul.addr %s340, 2
      %s342 = smul.addr %s341, 8
      %s343 = scalar_lea.vmem %s4, %s342
      // Predicated region
      $region37: #{conv_norm_in_rel_forward.1} parent=35 // pred_check
        %p344 = pneg %p122
      $region38: #{conv_norm_in_rel_forward.1} parent=35 // pred_check_branch
        %346 = sbr.rel (%p344) target = $region40
      $region39: #{conv_norm_in_rel_forward.1} parent=35 // pred_region
        _
      $region40: #{conv_norm_in_rel_forward.1} parent=35 // pred_fallthru
        _
    $region36: #{conv_norm_in_rel_forward.1} parent=5 // pred_fallthru
      _
    %p347 = scmp.le.s32.totalorder 2, %s10
    // Predicated region
    $region41: #{conv_norm_in_rel_forward.1} parent=5 // pred_check
      %p348 = pneg %p347
    $region42: #{conv_norm_in_rel_forward.1} parent=5 // pred_check_branch
      %350 = sbr.rel (%p348) target = $region44
    $region43: #{conv_norm_in_rel_forward.1} parent=5 // pred_region
      %s351 = ssub.s32 %s10, 2
      // Predicated region
      $region45: #{conv_norm_in_rel_forward.1} parent=43 // pred_check
        %p352 = pneg %p128
      $region46: #{conv_norm_in_rel_forward.1} parent=43 // pred_check_branch
        %354 = sbr.rel (%p352) target = $region48
      $region47: #{conv_norm_in_rel_forward.1} parent=43 // pred_region
        %p355 = scmp.lt.s32.totalorder %s16, 1
        %s356 = scalar_select %p355, %s16, 1
        %s357 = smul.addr %s356, 2
        %s358 = smul.addr %s357, 8
        %s359 = scalar_lea.vmem %s4, %s358
      $region48: #{conv_norm_in_rel_forward.1} parent=43 // pred_fallthru
        _
    $region44: #{conv_norm_in_rel_forward.1} parent=5 // pred_fallthru
      _
  $region6: #{conv_norm_in_rel_forward.1} parent=0 // loop_footer
    %s14 = sadd.s32 1, %s10
  $region7: #{conv_norm_in_rel_forward.1} parent=0 // loop_footer_branch
    %9 = sbr.rel target = $region3
  $region8: #{conv_norm_in_rel_forward.1} parent=0 // loop_exit
    _

</llo_original>
